<compile_context>
chip_gen: v7x
topology: tpu7x:2x2x1
jax: 0.10.0
libtpu: 0.0.40
codegen_flags: <defaults>
</compile_context>

<pallas_src>
import functools

import jax
import jax.numpy as jnp
from jax.experimental import pallas as pl
from jax.experimental.pallas import tpu as pltpu

LANE = 128            # vreg lane width
MAX_TILE_ROWS = 2048  # up to (2048, 128) f32 per input tile = 1 MiB
NUM_CHUNKS = 2        # independent partial-reduction chunks ("parallel" axis)


def _round_up(x, m):
    return (x + m - 1) // m * m


def masked_l1_kernel(rows_total, tiles_per_chunk, tile_rows,
                     p_ref, t_ref, sum_out_ref, cnt_out_ref,
                     sum_acc, cnt_acc):
    """Per-chunk accumulation of sum(|p - t|) and count over non-NaN targets."""
    c = pl.program_id(0)   # chunk (parallel)
    i = pl.program_id(1)   # tile within chunk (arbitrary / reduction)

    @pl.when(i == 0)
    def _init():
        sum_acc[...] = jnp.zeros_like(sum_acc)
        cnt_acc[...] = jnp.zeros_like(cnt_acc)

    p = p_ref[...].astype(jnp.float32)
    t = t_ref[...].astype(jnp.float32)

    # Unclamped global tile index: the input index_map clamps the DMA so it
    # stays in-bounds, while this mask (using the unclamped index) zeroes out
    # over-read rows of partial tiles and entirely-dead tiles.
    tile_idx = c * tiles_per_chunk + i
    row_ids = tile_idx * tile_rows + jax.lax.broadcasted_iota(
        jnp.int32, (tile_rows, LANE), 0)
    valid = jnp.logical_and(jnp.logical_not(jnp.isnan(t)),
                            row_ids < rows_total)

    # Pure VPU elementwise accumulation in the hot loop (no cross-lane work).
    sum_acc[...] += jnp.where(valid, jnp.abs(p - t), jnp.float32(0.0))
    cnt_acc[...] += valid.astype(jnp.float32)

    @pl.when(i == pl.num_programs(1) - 1)
    def _finalize():
        # One-time cross-lane/sublane reduce per chunk; broadcast the scalar
        # into a lane-dense (1, 8, 128) output block.
        sum_out_ref[...] = jnp.broadcast_to(jnp.sum(sum_acc[...]),
                                            sum_out_ref.shape)
        cnt_out_ref[...] = jnp.broadcast_to(jnp.sum(cnt_acc[...]),
                                            cnt_out_ref.shape)


@jax.jit
def masked_l1_loss(predictions, targets):
    """Masked L1 loss: mean(|pred - target|) over positions where target is not NaN."""
    p = predictions.reshape(-1)
    t = targets.reshape(-1)
    n = p.shape[0]

    # Only pad when numel is not a multiple of the lane width.  Targets are
    # padded with NaN so padded elements are masked by the NaN check itself.
    rem = n % LANE
    if rem:
        pad = LANE - rem
        p = jnp.pad(p, (0, pad))
        t = jnp.pad(t, (0, pad), constant_values=jnp.nan)
    rows = p.shape[0] // LANE
    p2 = p.reshape(rows, LANE)   # free reshape of a contiguous flat array
    t2 = t.reshape(rows, LANE)

    tile_rows = min(MAX_TILE_ROWS, _round_up(rows, 8))
    total_tiles = _round_up(rows, tile_rows) // tile_rows
    n_chunks = min(NUM_CHUNKS, total_tiles)
    tiles_per_chunk = _round_up(total_tiles, n_chunks) // n_chunks

    def in_map(c, i):
        # Clamp so dead tiles (when n_chunks * tiles_per_chunk > total_tiles)
        # re-read an in-bounds tile; the in-kernel row mask zeroes them out.
        tidx = jnp.minimum(c * tiles_per_chunk + i, total_tiles - 1)
        return (tidx, 0)

    kernel = functools.partial(masked_l1_kernel, rows, tiles_per_chunk, tile_rows)

    sums, cnts = pl.pallas_call(
        kernel,
        out_shape=(
            jax.ShapeDtypeStruct((n_chunks, 8, LANE), jnp.float32),
            jax.ShapeDtypeStruct((n_chunks, 8, LANE), jnp.float32),
        ),
        grid_spec=pltpu.PrefetchScalarGridSpec(
            num_scalar_prefetch=0,
            grid=(n_chunks, tiles_per_chunk),
            in_specs=[
                pl.BlockSpec((tile_rows, LANE), in_map),
                pl.BlockSpec((tile_rows, LANE), in_map),
            ],
            out_specs=[
                pl.BlockSpec((1, 8, LANE), lambda c, i: (c, 0, 0)),
                pl.BlockSpec((1, 8, LANE), lambda c, i: (c, 0, 0)),
            ],
            scratch_shapes=[
                pltpu.VMEM((tile_rows, LANE), jnp.float32),  # running |p - t| sum
                pltpu.VMEM((tile_rows, LANE), jnp.float32),  # running valid count
            ],
        ),
        compiler_params=pltpu.CompilerParams(
            # Chunk axis is parallel (splits across TCs on v7x); tile axis is a
            # sequential reduction.
            dimension_semantics=("parallel", "arbitrary"),
        ),
    )(p2, t2)

    total_sum = jnp.sum(sums[:, 0, 0])
    total_cnt = jnp.sum(cnts[:, 0, 0])
    # Matches torch: mean over an empty selection is NaN (0 / 0).
    return total_sum / total_cnt


def masked_l1_loss_ref(predictions, targets):
    """Pure-JAX reference matching the PyTorch semantics."""
    valid = jnp.logical_not(jnp.isnan(targets))
    diff = jnp.where(valid, jnp.abs(predictions - targets), 0.0)
    return jnp.sum(diff) / jnp.sum(valid.astype(jnp.float32))


def _check(shape, key):
    kp, kt, km = jax.random.split(key, 3)
    predictions = jax.random.normal(kp, shape, dtype=jnp.float32)
    targets = jax.random.normal(kt, shape, dtype=jnp.float32)
    # Sprinkle NaNs into targets (~25% masked), as the module expects.
    nan_mask = jax.random.uniform(km, shape) < 0.25
    targets = jnp.where(nan_mask, jnp.nan, targets)

    loss = jax.block_until_ready(masked_l1_loss(predictions, targets))
    ref = masked_l1_loss_ref(predictions, targets)
    assert not jnp.isnan(loss), (shape, loss)
    assert jnp.allclose(loss, ref, rtol=1e-4, atol=1e-6), (shape, loss, ref)


if __name__ == "__main__":
    key = jax.random.PRNGKey(0)
    k1, k2, k3 = jax.random.split(key, 3)

    # Primary small NCHW case: batch=2, channels=4, spatial=16x16.
    _check((2, 4, 16, 16), k1)
    # Ragged case (numel not a multiple of 128) -> exercises the NaN lane pad.
    _check((2, 4, 15, 17), k2)
    # Larger case -> exercises multiple tiles and the 2-chunk parallel split.
    _check((2, 4, 256, 256), k3)

    print("KERNEL_OK")
</pallas_src>

<mosaic_0001>
module attributes {stable_mosaic.version = 11 : i64} {
  func.func @masked_l1_kernel(%arg0: i32, %arg1: i32, %arg2: memref<16x128xf32, #tpu.memory_space<vmem>>, %arg3: memref<16x128xf32, #tpu.memory_space<vmem>>, %arg4: memref<1x8x128xf32, #tpu.memory_space<vmem>>, %arg5: memref<1x8x128xf32, #tpu.memory_space<vmem>>, %arg6: memref<16x128xf32, #tpu.memory_space<vmem>>, %arg7: memref<16x128xf32, #tpu.memory_space<vmem>>) attributes {dimension_semantics = [#tpu.dimension_semantics<parallel>, #tpu.dimension_semantics<arbitrary>], iteration_bounds = array<i64: 1, 1>, scalar_prefetch = 0 : i64, scratch_operands = 2 : i64, tpu.core_type = #tpu.core_type<tc>, window_params = [{transform_indices = @transform_0, window_bounds = array<i64: 16, 128>}, {transform_indices = @transform_1, window_bounds = array<i64: 16, 128>}, {transform_indices = @transform_2, window_bounds = array<i64: 1, 8, 128>}, {transform_indices = @transform_3, window_bounds = array<i64: 1, 8, 128>}]} {
    %c0_i32 = arith.constant 0 : i32
    %0 = arith.cmpi eq, %arg1, %c0_i32 : i32
    %1 = arith.extui %0 : i1 to i32
    %c0_i32_0 = arith.constant 0 : i32
    %2 = arith.cmpi ne, %1, %c0_i32_0 : i32
    scf.if %2 {
      %cst_16 = arith.constant 0.000000e+00 : f32
      %31 = vector.broadcast %cst_16 : f32 to vector<16x128xf32>
      %c0_17 = arith.constant 0 : index
      %c0_18 = arith.constant 0 : index
      %32 = vector.load %arg6[%c0_17, %c0_18] : memref<16x128xf32, #tpu.memory_space<vmem>>, vector<16x128xf32>
      tpu.vector_store %arg6[%c0_17, %c0_18], %31 {strides = array<i32>} : memref<16x128xf32, #tpu.memory_space<vmem>>, vector<16x128xf32>,
      %cst_19 = arith.constant 0.000000e+00 : f32
      %33 = vector.broadcast %cst_19 : f32 to vector<16x128xf32>
      %c0_20 = arith.constant 0 : index
      %c0_21 = arith.constant 0 : index
      %34 = vector.load %arg7[%c0_20, %c0_21] : memref<16x128xf32, #tpu.memory_space<vmem>>, vector<16x128xf32>
      tpu.vector_store %arg7[%c0_20, %c0_21], %33 {strides = array<i32>} : memref<16x128xf32, #tpu.memory_space<vmem>>, vector<16x128xf32>,
    } else {
    }
    %c0 = arith.constant 0 : index
    %c0_1 = arith.constant 0 : index
    %3 = vector.load %arg2[%c0, %c0_1] : memref<16x128xf32, #tpu.memory_space<vmem>>, vector<16x128xf32>
    %c0_2 = arith.constant 0 : index
    %c0_3 = arith.constant 0 : index
    %4 = vector.load %arg3[%c0_2, %c0_3] : memref<16x128xf32, #tpu.memory_space<vmem>>, vector<16x128xf32>
    %c1_i32 = arith.constant 1 : i32
    %5 = arith.muli %arg0, %c1_i32 : i32
    %6 = arith.addi %5, %arg1 : i32
    %c16_i32 = arith.constant 16 : i32
    %7 = arith.muli %6, %c16_i32 : i32
    %8 = tpu.iota {dimensions = array<i32: 0>} : vector<16x128xi32>
    %9 = vector.broadcast %7 : i32 to vector<16x128xi32>
    %10 = arith.addi %9, %8 : vector<16x128xi32>
    %11 = arith.cmpf one, %4, %4 : vector<16x128xf32>
    %cst = arith.constant dense<true> : vector<16x128xi1>
    %12 = arith.xori %11, %cst : vector<16x128xi1>
    %c16_i32_4 = arith.constant 16 : i32
    %13 = vector.broadcast %c16_i32_4 : i32 to vector<16x128xi32>
    %14 = arith.cmpi slt, %10, %13 : vector<16x128xi32>
    %15 = arith.andi %12, %14 : vector<16x128xi1>
    %c0_5 = arith.constant 0 : index
    %c0_6 = arith.constant 0 : index
    %16 = vector.load %arg6[%c0_5, %c0_6] : memref<16x128xf32, #tpu.memory_space<vmem>>, vector<16x128xf32>
    %17 = arith.subf %3, %4 : vector<16x128xf32>
    %18 = math.absf %17 : vector<16x128xf32>
    %cst_7 = arith.constant 0.000000e+00 : f32
    %19 = vector.broadcast %cst_7 : f32 to vector<16x128xf32>
    %20 = arith.select %15, %18, %19 : vector<16x128xi1>, vector<16x128xf32>
    %21 = arith.addf %16, %20 : vector<16x128xf32>
    %c0_8 = arith.constant 0 : index
    %c0_9 = arith.constant 0 : index
    %22 = vector.load %arg6[%c0_8, %c0_9] : memref<16x128xf32, #tpu.memory_space<vmem>>, vector<16x128xf32>
    tpu.vector_store %arg6[%c0_8, %c0_9], %21 {strides = array<i32>} : memref<16x128xf32, #tpu.memory_space<vmem>>, vector<16x128xf32>,
    %c0_10 = arith.constant 0 : index
    %c0_11 = arith.constant 0 : index
    %23 = vector.load %arg7[%c0_10, %c0_11] : memref<16x128xf32, #tpu.memory_space<vmem>>, vector<16x128xf32>
    %24 = arith.extui %15 : vector<16x128xi1> to vector<16x128xi32>
    %25 = arith.sitofp %24 : vector<16x128xi32> to vector<16x128xf32>
    %26 = arith.addf %23, %25 : vector<16x128xf32>
    %c0_12 = arith.constant 0 : index
    %c0_13 = arith.constant 0 : index
    %27 = vector.load %arg7[%c0_12, %c0_13] : memref<16x128xf32, #tpu.memory_space<vmem>>, vector<16x128xf32>
    tpu.vector_store %arg7[%c0_12, %c0_13], %26 {strides = array<i32>} : memref<16x128xf32, #tpu.memory_space<vmem>>, vector<16x128xf32>,
    %c0_i32_14 = arith.constant 0 : i32
    %28 = arith.cmpi eq, %arg1, %c0_i32_14 : i32
    %29 = arith.extui %28 : i1 to i32
    %c0_i32_15 = arith.constant 0 : i32
    %30 = arith.cmpi ne, %29, %c0_i32_15 : i32
    scf.if %30 {
      %c0_16 = arith.constant 0 : index
      %c0_17 = arith.constant 0 : index
      %31 = vector.load %arg6[%c0_16, %c0_17] : memref<16x128xf32, #tpu.memory_space<vmem>>, vector<16x128xf32>
      %32 = vector.shape_cast %31 : vector<16x128xf32> to vector<1x16x128xf32>
      %cst_18 = arith.constant dense<0.000000e+00> : vector<1xf32>
      %33 = vector.multi_reduction <add>, %32, %cst_18 [1, 2] : vector<1x16x128xf32> to vector<1xf32>
      %34 = vector.shape_cast %33 : vector<1xf32> to vector<1x1x1xf32>
      %35 = vector.extract %34[0, 0, 0] : f32 from vector<1x1x1xf32>
      %36 = vector.broadcast %35 : f32 to vector<1x8x128xf32>
      %c0_19 = arith.constant 0 : index
      %c0_20 = arith.constant 0 : index
      %c0_21 = arith.constant 0 : index
      %37 = vector.load %arg4[%c0_19, %c0_20, %c0_21] : memref<1x8x128xf32, #tpu.memory_space<vmem>>, vector<1x8x128xf32>
      tpu.vector_store %arg4[%c0_19, %c0_20, %c0_21], %36 {strides = array<i32>} : memref<1x8x128xf32, #tpu.memory_space<vmem>>, vector<1x8x128xf32>,
      %c0_22 = arith.constant 0 : index
      %c0_23 = arith.constant 0 : index
      %38 = vector.load %arg7[%c0_22, %c0_23] : memref<16x128xf32, #tpu.memory_space<vmem>>, vector<16x128xf32>
      %39 = vector.shape_cast %38 : vector<16x128xf32> to vector<1x16x128xf32>
      %cst_24 = arith.constant dense<0.000000e+00> : vector<1xf32>
      %40 = vector.multi_reduction <add>, %39, %cst_24 [1, 2] : vector<1x16x128xf32> to vector<1xf32>
      %41 = vector.shape_cast %40 : vector<1xf32> to vector<1x1x1xf32>
      %42 = vector.extract %41[0, 0, 0] : f32 from vector<1x1x1xf32>
      %43 = vector.broadcast %42 : f32 to vector<1x8x128xf32>
      %c0_25 = arith.constant 0 : index
      %c0_26 = arith.constant 0 : index
      %c0_27 = arith.constant 0 : index
      %44 = vector.load %arg5[%c0_25, %c0_26, %c0_27] : memref<1x8x128xf32, #tpu.memory_space<vmem>>, vector<1x8x128xf32>
      tpu.vector_store %arg5[%c0_25, %c0_26, %c0_27], %43 {strides = array<i32>} : memref<1x8x128xf32, #tpu.memory_space<vmem>>, vector<1x8x128xf32>,
    } else {
    }
    return
  }
  func.func @transform_0(%arg0: i32, %arg1: i32) -> (i32, i32) {
    %c1_i32 = arith.constant 1 : i32
    %0 = arith.muli %arg0, %c1_i32 : i32
    %1 = arith.addi %0, %arg1 : i32
    %c0_i32 = arith.constant 0 : i32
    %2 = arith.minsi %1, %c0_i32 : i32
    %c0_i32_0 = arith.constant 0 : i32
    %c0_i32_1 = arith.constant 0 : i32
    return %2, %c0_i32_0 : i32, i32
  }
  func.func @transform_1(%arg0: i32, %arg1: i32) -> (i32, i32) {
    %c1_i32 = arith.constant 1 : i32
    %0 = arith.muli %arg0, %c1_i32 : i32
    %1 = arith.addi %0, %arg1 : i32
    %c0_i32 = arith.constant 0 : i32
    %2 = arith.minsi %1, %c0_i32 : i32
    %c0_i32_0 = arith.constant 0 : i32
    %c0_i32_1 = arith.constant 0 : i32
    return %2, %c0_i32_0 : i32, i32
  }
  func.func @transform_2(%arg0: i32, %arg1: i32) -> (i32, i32, i32) {
    %c0_i32 = arith.constant 0 : i32
    %c0_i32_0 = arith.constant 0 : i32
    %c0_i32_1 = arith.constant 0 : i32
    return %arg0, %c0_i32, %c0_i32_0 : i32, i32, i32
  }
  func.func @transform_3(%arg0: i32, %arg1: i32) -> (i32, i32, i32) {
    %c0_i32 = arith.constant 0 : i32
    %c0_i32_0 = arith.constant 0 : i32
    %c0_i32_1 = arith.constant 0 : i32
    return %arg0, %c0_i32, %c0_i32_0 : i32, i32, i32
  }
}

</mosaic_0001>

<llo_original>
// kernel: masked_l1_loss.1
$region0: #{masked_l1_loss.1}
  #allocation0 [shape = 'u32[]', space=smem, size = 0x4, offset = 0x4, fixed_abs, tag = 'smem constant byte address 0x4 - core index']
  #allocation1 [shape = 'u32[144,128]{1,0:T(1,128)}', space=vmem, size = 0x12000, scoped, tag = 'internal scratch']
  #allocation2 [shape = 'f32[16,128]{1,0:T(8,128)}', space=vmem, size = 0x2000, scoped, tag = 'scratch operand']
  #allocation3 [shape = 'f32[16,128]{1,0:T(8,128)}', space=vmem, size = 0x2000, scoped, tag = 'scratch operand']
  %s0 = inlined_call_operand.vmem [shape: f32[16,128], index: 0, kind: input, shape index: {}]
  %s1 = inlined_call_operand.vmem [shape: f32[16,128], index: 1, kind: input, shape index: {}]
  %s2 = inlined_call_operand.vmem [shape: f32[1,8,128], index: 2, kind: output, shape index: {0}]
  %s3 = inlined_call_operand.vmem [shape: f32[1,8,128], index: 3, kind: output, shape index: {1}]
  %4 = xla_tuple %s2, %s3
  %s5 = sld [smem:[#allocation0]]
  $region34: #{masked_l1_loss.1} parent=0
    _
  %s7 = ssub.s32 1, %s5
  %s8 = scalar_select 0, %s7, %s5
  // Predicated region
  $region2: #{masked_l1_loss.1} parent=0 // pred_check
    _
  $region3: #{masked_l1_loss.1} parent=0 // pred_check_branch
    %10 = sbr.rel (0) target = $region5
  $region4: #{masked_l1_loss.1} parent=0 // pred_region
    %s11 = sadd.s32 0, 0
    %p12 = scmp.lt.s32.totalorder %s11, 0
    %s13 = scalar_select %p12, %s11, 0
    %s14 = smul.u32 2, %s13
    %p15 = scmp.lt.s32.totalorder %s14, 1
    %s16 = scalar_select %p15, %s14, 1
    %s17 = smul.addr %s16, 8
    %s18 = scalar_lea.vmem %s0, %s17
    %s19 = sadd.s32 0, 0
    %p20 = scmp.lt.s32.totalorder %s19, 0
    %s21 = scalar_select %p20, %s19, 0
    %s22 = smul.u32 2, %s21
  $region5: #{masked_l1_loss.1} parent=0 // pred_fallthru
    _
  // Predicated region
  $region6: #{masked_l1_loss.1} parent=0 // pred_check
    _
  $region7: #{masked_l1_loss.1} parent=0 // pred_check_branch
    %24 = sbr.rel (0) target = $region9
  $region8: #{masked_l1_loss.1} parent=0 // pred_region
    %s25 = sadd.s32 0, 0
    %p26 = scmp.lt.s32.totalorder %s25, 0
    %s27 = scalar_select %p26, %s25, 0
    %s28 = smul.u32 2, %s27
    %p29 = scmp.lt.s32.totalorder %s28, 1
    %s30 = scalar_select %p29, %s28, 1
    %s31 = smul.addr %s30, 8
    %s32 = scalar_lea.vmem %s1, %s31
    %s33 = sadd.s32 0, 0
    %p34 = scmp.lt.s32.totalorder %s33, 0
    %s35 = scalar_select %p34, %s33, 0
    %s36 = smul.u32 2, %s35
  $region9: #{masked_l1_loss.1} parent=0 // pred_fallthru
    _
  %s37 = sadd.s32 0, 0
  %p38 = scmp.lt.s32.totalorder %s37, 0
  %s39 = scalar_select %p38, %s37, 0
  %s40 = smul.u32 2, %s39
  %p41 = scmp.lt.s32.totalorder %s40, 1
  %s42 = scalar_select %p41, %s40, 1
  %s43 = smul.addr %s42, 8
  %s44 = scalar_lea.vmem %s0, %s43
  %s45 = sadd.s32 0, 0
  %p46 = scmp.lt.s32.totalorder %s45, 0
  %s47 = scalar_select %p46, %s45, 0
  %s48 = smul.u32 2, %s47
  %p49 = scmp.lt.s32.totalorder %s48, 1
  %s50 = scalar_select %p49, %s48, 1
  %s51 = smul.addr %s50, 8
  %s52 = scalar_lea.vmem %s1, %s51
  %s53 = sadd.s32 0, 0
  %p54 = scmp.lt.s32.totalorder %s53, 0
  %s55 = scalar_select %p54, %s53, 0
  %s56 = smul.u32 2, %s55
  %p57 = scmp.lt.s32.totalorder %s56, 1
  %s58 = scalar_select %p57, %s56, 1
  %s59 = smul.addr %s58, 8
  %s60 = scalar_lea.vmem %s0, %s59
  %s61 = sadd.s32 0, 0
  %p62 = scmp.lt.s32.totalorder %s61, 0
  %s63 = scalar_select %p62, %s61, 0
  %s64 = smul.u32 2, %s63
  %s65 = sadd.s32 0, 0
  %p66 = scmp.lt.s32.totalorder %s65, 0
  %s67 = scalar_select %p66, %s65, 0
  %s68 = smul.u32 2, %s67
  %p69 = scmp.lt.s32.totalorder %s68, 1
  %s70 = scalar_select %p69, %s68, 1
  %s71 = smul.addr %s70, 8
  %s72 = scalar_lea.vmem %s1, %s71
  %s73 = sadd.s32 0, 0
  %p74 = scmp.lt.s32.totalorder %s73, 0
  %s75 = scalar_select %p74, %s73, 0
  %s76 = smul.u32 2, %s75
  %p77 = scmp.eq.s32.totalorder 0, 0
  // Predicated region
  $region10: #{masked_l1_loss.1} parent=0 // pred_check
    %p78 = pneg %p77
  $region11: #{masked_l1_loss.1} parent=0 // pred_check_branch
    %80 = sbr.rel (%p78) target = $region13
  $region12: #{masked_l1_loss.1} parent=0 // pred_region
    %81 = vst [vmem:[#allocation2] sm:$0xff] 0.0
    %82 = vst [vmem:[#allocation2 + $0x8] sm:$0xff] 0.0
    %83 = vst [vmem:[#allocation3] sm:$0xff] 0.0
    %84 = vst [vmem:[#allocation3 + $0x8] sm:$0xff] 0.0
  $region13: #{masked_l1_loss.1} parent=0 // pred_fallthru
    _
  %v85 = vld [vmem:[%s60] sm:$0xff]
  %v86 = vld [vmem:[%s60 + $0x8] sm:$0xff]
  %v87 = vld [vmem:[%s72] sm:$0xff]
  %v88 = vld [vmem:[%s72 + $0x8] sm:$0xff]
  %s89 = sadd.s32 0, 0
  %s90 = smul.u32 %s89, 16
  %v91 = vlaneseq
  %v92 = vshrl.u32 %v91, 7
  %v93 = vadd.s32 %v92, 8
  %v94 = vstv %s90
  %v95 = vadd.s32 %v94, %v92
  %v96 = vadd.s32 %v94, %v93
  %vm97 = vcmp.ne.f32.partialorder %v87, %v87
  %vm98 = vcmp.ne.f32.partialorder %v88, %v88
  %vm99 = vmxor %vm97, 1
  %vm100 = vmxor %vm98, 1
  %vm101 = vcmp.lt.s32.totalorder %v95, 16
  %vm102 = vcmp.lt.s32.totalorder %v96, 16
  %vm103 = vmand %vm99, %vm101
  %vm104 = vmand %vm100, %vm102
  %v105 = vld [vmem:[#allocation2] sm:$0xff]
  %v106 = vld [vmem:[#allocation2 + $0x8] sm:$0xff]
  %v107 = vsub.f32 %v85, %v87
  %v108 = vsub.f32 %v86, %v88
  %v109 = vand.u32 2147483647, %v107
  %v110 = vand.u32 2147483647, %v108
  %v111 = vsel %vm103, %v109, 0.0
  %v112 = vsel %vm104, %v110, 0.0
  %v113 = vadd.f32 %v105, %v111
  %v114 = vadd.f32 %v106, %v112
  %115 = vst [vmem:[#allocation2] sm:$0xff] %v113
  %116 = vst [vmem:[#allocation2 + $0x8] sm:$0xff] %v114
  %v117 = vld [vmem:[#allocation3] sm:$0xff]
  %v118 = vld [vmem:[#allocation3 + $0x8] sm:$0xff]
  %v119 = vsel %vm103, 1, 0
  %v120 = vsel %vm104, 1, 0
  %v121 = vcvt.s32.f32 %v119
  %v122 = vcvt.s32.f32 %v120
  %v123 = vadd.f32 %v117, %v121
  %v124 = vadd.f32 %v118, %v122
  %125 = vst [vmem:[#allocation3] sm:$0xff] %v123
  %126 = vst [vmem:[#allocation3 + $0x8] sm:$0xff] %v124
  // Predicated region
  $region14: #{masked_l1_loss.1} parent=0 // pred_check
    %p127 = pneg %p77
  $region15: #{masked_l1_loss.1} parent=0 // pred_check_branch
    %129 = sbr.rel (%p127) target = $region17
  $region16: #{masked_l1_loss.1} parent=0 // pred_region
    %v130 = vld [vmem:[#allocation2] sm:$0xff]
    %v131 = vld [vmem:[#allocation2 + $0x8] sm:$0xff]
    %v132 = vadd.f32 %v130, %v131
    %133 = vadd.xlane.f32.xlu0 %v132
    %v134 = vpop.xlane.xlu0 %133
    %v135 = vrot.slane %v134, 4
    %v136 = vadd.f32 %v134, %v135
    %v137 = vrot.slane %v136, 2
    %v138 = vadd.f32 %v136, %v137
    %v139 = vrot.slane %v138, 1
    %v140 = vadd.f32 %v138, %v139
    %s141 = vtos %v140
    %v142 = vstv %s141
    %143 = vst [vmem:[%s2] sm:$0xff] %v142
    %v144 = vld [vmem:[#allocation3] sm:$0xff]
    %v145 = vld [vmem:[#allocation3 + $0x8] sm:$0xff]
    %v146 = vadd.f32 %v144, %v145
    %147 = vadd.xlane.f32.xlu0 %v146
    %v148 = vpop.xlane.xlu0 %147
    %v149 = vrot.slane %v148, 4
    %v150 = vadd.f32 %v148, %v149
    %v151 = vrot.slane %v150, 2
    %v152 = vadd.f32 %v150, %v151
    %v153 = vrot.slane %v152, 1
    %v154 = vadd.f32 %v152, %v153
    %s155 = vtos %v154
    %v156 = vstv %s155
    %157 = vst [vmem:[%s3] sm:$0xff] %v156
  $region17: #{masked_l1_loss.1} parent=0 // pred_fallthru
    _
  // Predicated region
  $region18: #{masked_l1_loss.1} parent=0 // pred_check
    _
  $region19: #{masked_l1_loss.1} parent=0 // pred_check_branch
    %159 = sbr.rel (0) target = $region21
  $region20: #{masked_l1_loss.1} parent=0 // pred_region
    _
  $region21: #{masked_l1_loss.1} parent=0 // pred_fallthru
    _
  // Predicated region
  $region22: #{masked_l1_loss.1} parent=0 // pred_check
    _
  $region23: #{masked_l1_loss.1} parent=0 // pred_check_branch
    %161 = sbr.rel (0) target = $region25
  $region24: #{masked_l1_loss.1} parent=0 // pred_region
    _
  $region25: #{masked_l1_loss.1} parent=0 // pred_fallthru
    _
  // Predicated region
  $region26: #{masked_l1_loss.1} parent=0 // pred_check
    _
  $region27: #{masked_l1_loss.1} parent=0 // pred_check_branch
    %163 = sbr.rel (0) target = $region29
  $region28: #{masked_l1_loss.1} parent=0 // pred_region
    _
  $region29: #{masked_l1_loss.1} parent=0 // pred_fallthru
    _
  // Predicated region
  $region30: #{masked_l1_loss.1} parent=0 // pred_check
    _
  $region31: #{masked_l1_loss.1} parent=0 // pred_check_branch
    %165 = sbr.rel (0) target = $region33
  $region32: #{masked_l1_loss.1} parent=0 // pred_region
    _
  $region33: #{masked_l1_loss.1} parent=0 // pred_fallthru
    _

</llo_original>
